<compile_context>
chip_gen: v7x
topology: tpu7x:2x2x1
jax: 0.10.0
libtpu: 0.0.40
codegen_flags: <defaults>
</compile_context>

<pallas_src>
import jax
import jax.numpy as jnp
from jax.experimental import pallas as pl
from jax.experimental.pallas import tpu as pltpu


def _make_dilated_kernel(dilation: int, tb: int):
    """Kernel for one (tb, 128*dilation) input tile -> (tb, 128) output tile."""
    n_row_chunks = tb // 128

    def kernel(e_ref, o_ref, t_ref):
        # e_ref: (TB, 128*d)  lane-dense input tile
        # o_ref: (TB, 128)    lane-dense output tile
        # t_ref: (128*d, 128) scratch holding one transposed 128-row slab
        for rc in range(n_row_chunks):
            r0 = rc * 128
            # Transpose the 128-row slab 128 lanes at a time (bounded vregs).
            for cc in range(dilation):
                c0 = cc * 128
                blk = e_ref[pl.ds(r0, 128), pl.ds(c0, 128)]          # (128,128)
                t_ref[pl.ds(c0, 128), :] = jnp.swapaxes(blk, 0, 1)
            # Every dilation-th sublane == phase-0 element of each neighbor
            # group; strided sublane read, lane axis stays unit-stride.
            sel = t_ref[pl.ds(0, 128, stride=dilation), :]           # (128,128)
            o_ref[pl.ds(r0, 128), :] = jnp.swapaxes(sel, 0, 1)

    return kernel


def _pick_row_tile(R: int, bytes_per_row: int, max_block_bytes: int):
    """Largest row-tile (multiple of 128) dividing R within the VMEM budget.

    Prefer >= 2 grid steps (multi-core chips shard the parallel axis), but
    never at the cost of dropping below 128 rows (that would lane-pad the
    transposed tiles and force masked partial stores)."""
    cands = [t for t in (4096, 2048, 1024, 512, 256, 128)
             if t * bytes_per_row <= max_block_bytes]
    for t in cands:                      # all candidates are >= 128 rows
        if R % t == 0 and R // t >= 2:
            return t
    for t in cands:
        if R % t == 0:
            return t
    return None


def dilated(edge_index, dilation: int = 1, *, prefer_pallas=None,
            min_pallas_bytes: int = 4 << 20):
    """Pallas equivalent of Dilated.forward (deterministic / eval path).

    prefer_pallas: True  -> use the Pallas kernel whenever geometry allows,
                   False -> always use the fused XLA strided slice,
                   None  -> auto (Pallas only when traffic >= min_pallas_bytes).
    """
    two, E = edge_index.shape
    assert two == 2
    d = int(dilation)
    if d <= 1:
        # PyTorch `[:, ::1]` is a no-op view -- return the input aliased.
        return edge_index

    def _fallback():
        # XLA strided slice: correct for any E/d, fuses into the consumer.
        return edge_index[:, ::d]

    if prefer_pallas is False:
        return _fallback()

    itemsize = edge_index.dtype.itemsize
    N = E // d
    traffic = 2 * E * itemsize + 2 * N * itemsize
    if prefer_pallas is None and traffic < min_pallas_bytes:
        # Tiny problem: a standalone pallas_call's launch + per-step overhead
        # would dominate a fraction-of-a-microsecond of HBM traffic.
        return _fallback()

    # Geometry the Pallas path supports; anything else -> fused XLA slice.
    is_pow2 = (d & (d - 1)) == 0
    if not (E % d == 0 and N % 128 == 0 and itemsize == 4
            and is_pow2 and d <= 16):
        return _fallback()

    C = 128 * d                      # lanes per row: 128 neighbor-groups of d
    R = (2 * E) // C                 # total rows (endpoint 0 rows, then 1)
    max_block_bytes = 4 << 20        # fits comfortably on v5e/v6e/v7x budgets
    TB = _pick_row_tile(R, C * 4, max_block_bytes)
    if TB is None:
        return _fallback()

    block_bytes = TB * C * 4
    scratch_bytes = C * 128 * 4
    # double-buffered input + double-buffered output + scratch + headroom
    vmem_bytes = int(block_bytes * (2 + 2 / d)) + scratch_bytes + (6 << 20)
    vmem_bytes = max(16 << 20, min(vmem_bytes, 32 << 20))

    x = edge_index.reshape(R, C)     # metadata reshape
    out = pl.pallas_call(
        _make_dilated_kernel(d, TB),
        out_shape=jax.ShapeDtypeStruct((R, 128), edge_index.dtype),
        grid=(R // TB,),
        in_specs=[pl.BlockSpec((TB, C), lambda i: (i, 0))],
        out_specs=pl.BlockSpec((TB, 128), lambda i: (i, 0)),
        scratch_shapes=[pltpu.VMEM((C, 128), edge_index.dtype)],
        compiler_params=pltpu.CompilerParams(
            dimension_semantics=("parallel",),
            vmem_limit_bytes=vmem_bytes),
    )(x)
    return out.reshape(2, N)         # metadata reshape


# TODO(synk): the stochastic *training* branch (torch.rand(1) < epsilon gate +
# torch.randperm subsampling of k out of k*dilation neighbors) has no clean
# deterministic Pallas equivalent; the stochastic=False / eval path (a strided
# slice) -- which the stochastic path also reduces to outside training -- is
# what is reproduced here.


if __name__ == "__main__":
    key = jax.random.PRNGKey(0)

    # knn-style edge list: E = num_points * k * dilation edges.
    num_points, k, d = 2048, 8, 2
    E = num_points * k * d                                   # 32768 edges
    edge_index = jax.random.randint(key, (2, E), 0, num_points, dtype=jnp.int32)

    # Force the Pallas path (auto mode routes this small problem to the fused
    # XLA slice) and check it against the reference strided slice.
    out = jax.block_until_ready(dilated(edge_index, d, prefer_pallas=True))
    ref = edge_index[:, ::d]
    assert out.shape == ref.shape == (2, E // d)
    assert bool(jnp.all(out == ref))

    # Auto mode on the same small problem takes the fallback; still correct.
    out_auto = jax.block_until_ready(dilated(edge_index, d))
    assert bool(jnp.all(out_auto == ref))

    # A second dilation factor exercises a different stride / tile geometry.
    d2 = 4
    e2 = jax.random.randint(jax.random.PRNGKey(1), (2, 2048 * 8 * d2), 0, 2048,
                            dtype=jnp.int32)
    out2 = jax.block_until_ready(dilated(e2, d2, prefer_pallas=True))
    assert bool(jnp.all(out2 == e2[:, ::d2]))

    # dilation == 1 fast path: pure pass-through (matches the torch no-op view).
    assert dilated(edge_index, 1) is edge_index

    # Non-conforming shapes (non-power-of-2 dilation, N % 128 != 0, E % d != 0)
    # route to the XLA fallback and stay correct.
    e3 = jax.random.randint(jax.random.PRNGKey(2), (2, 100 * 9 * 3), 0, 100,
                            dtype=jnp.int32)
    assert bool(jnp.all(dilated(e3, 3, prefer_pallas=True) == e3[:, ::3]))
    e4 = jax.random.randint(jax.random.PRNGKey(3), (2, 1000), 0, 100,
                            dtype=jnp.int32)
    assert bool(jnp.all(dilated(e4, 3) == e4[:, ::3]))

    print("KERNEL_OK")
</pallas_src>

<mosaic_0001>
module attributes {stable_mosaic.version = 11 : i64} {
  func.func @kernel(%arg0: i32, %arg1: memref<128x256xi32, #tpu.memory_space<vmem>>, %arg2: memref<128x128xi32, #tpu.memory_space<vmem>>, %arg3: memref<256x128xi32, #tpu.memory_space<vmem>>) attributes {dimension_semantics = [#tpu.dimension_semantics<parallel>], iteration_bounds = array<i64: 2>, scalar_prefetch = 0 : i64, scratch_operands = 1 : i64, tpu.core_type = #tpu.core_type<tc>, window_params = [{transform_indices = @transform_0, window_bounds = array<i64: 128, 256>}, {transform_indices = @transform_1, window_bounds = array<i64: 128, 128>}]} {
    %c0 = arith.constant 0 : index
    %c0_0 = arith.constant 0 : index
    %0 = vector.load %arg1[%c0, %c0_0] : memref<128x256xi32, #tpu.memory_space<vmem>>, vector<128x128xi32>
    %1 = tpu.transpose %0, [1, 0] : vector<128x128xi32> -> vector<128x128xi32>
    %c0_1 = arith.constant 0 : index
    %c0_2 = arith.constant 0 : index
    %2 = vector.load %arg3[%c0_1, %c0_2] : memref<256x128xi32, #tpu.memory_space<vmem>>, vector<128x128xi32>
    tpu.vector_store %arg3[%c0_1, %c0_2], %1 {strides = array<i32>} : memref<256x128xi32, #tpu.memory_space<vmem>>, vector<128x128xi32>,
    %c0_3 = arith.constant 0 : index
    %c128 = arith.constant 128 : index
    %3 = vector.load %arg1[%c0_3, %c128] : memref<128x256xi32, #tpu.memory_space<vmem>>, vector<128x128xi32>
    %4 = tpu.transpose %3, [1, 0] : vector<128x128xi32> -> vector<128x128xi32>
    %c128_4 = arith.constant 128 : index
    %c0_5 = arith.constant 0 : index
    %5 = vector.load %arg3[%c128_4, %c0_5] : memref<256x128xi32, #tpu.memory_space<vmem>>, vector<128x128xi32>
    tpu.vector_store %arg3[%c128_4, %c0_5], %4 {strides = array<i32>} : memref<256x128xi32, #tpu.memory_space<vmem>>, vector<128x128xi32>,
    %c0_6 = arith.constant 0 : index
    %c0_7 = arith.constant 0 : index
    %6 = tpu.strided_load %arg3[%c0_6, %c0_7] {strides = array<i32: 2, 1>} : memref<256x128xi32, #tpu.memory_space<vmem>>, vector<128x128xi32>
    %7 = tpu.transpose %6, [1, 0] : vector<128x128xi32> -> vector<128x128xi32>
    %c0_8 = arith.constant 0 : index
    %c0_9 = arith.constant 0 : index
    %8 = vector.load %arg2[%c0_8, %c0_9] : memref<128x128xi32, #tpu.memory_space<vmem>>, vector<128x128xi32>
    tpu.vector_store %arg2[%c0_8, %c0_9], %7 {strides = array<i32>} : memref<128x128xi32, #tpu.memory_space<vmem>>, vector<128x128xi32>,
    return
  }
  func.func @transform_0(%arg0: i32) -> (i32, i32) {
    %c0_i32 = arith.constant 0 : i32
    %c0_i32_0 = arith.constant 0 : i32
    return %arg0, %c0_i32 : i32, i32
  }
  func.func @transform_1(%arg0: i32) -> (i32, i32) {
    %c0_i32 = arith.constant 0 : i32
    %c0_i32_0 = arith.constant 0 : i32
    return %arg0, %c0_i32 : i32, i32
  }
}

</mosaic_0001>

<llo_original>
// kernel: tpu_custom_call.1
$region0: #{tpu_custom_call.1}
  #allocation0 [shape = 'u32[]', space=smem, size = 0x4, offset = 0x4, fixed_abs, tag = 'smem constant byte address 0x4 - core index']
  #allocation1 [shape = 'u32[144,128]{1,0:T(1,128)}', space=vmem, size = 0x12000, scoped, tag = 'internal scratch']
  #allocation2 [shape = 's32[256,128]{1,0:T(8,128)}', space=vmem, size = 0x20000, scoped, tag = 'scratch operand']
  %s0 = inlined_call_operand.hbm [shape: s32[256,256], index: 0, kind: input, shape index: {}]
  %s1 = inlined_call_operand.hbm [shape: s32[256,128], index: 1, kind: output, shape index: {}]
  %s2 = sld [smem:[#allocation0]]
  $region41: #{tpu_custom_call.1} parent=0
    _
  %s4 = ssub.s32 1, %s2
  %s5 = scalar_select 0, %s4, %s2
  $region1: #{tpu_custom_call.1} parent=0
    #allocation3 [shape = 'u8[262144]{0}', space=vmem, size = 0x40000, scoped, tag = 'input window, operand 0']
    #allocation4 [shape = 's32[2]{0}', space=sflag, size = 0x8, scoped, tag = 'scoped memory for tpu_custom_call.1']
    #allocation5 [shape = 's32[2]{0}', space=sflag, size = 0x8, scoped, tag = 'scoped memory for tpu_custom_call.1']
    #allocation6 [shape = 'u8[131072]{0}', space=vmem, size = 0x20000, scoped, tag = 'output window, operand 0']
    %6 = vsyncpa [#allocation4], 0
    %s7 = scalar_lea.sflag [#allocation4], 1
    %8 = vsyncpa %s7, 0
    %9 = vsyncpa [#allocation5], 0
    %s10 = scalar_lea.sflag [#allocation5], 1
    %11 = vsyncpa %s10, 0
    loop: start=0, step=1, limit=4
    $region2: #{tpu_custom_call.1} parent=1 // loop_pre_header
      _
    $region3: #{tpu_custom_call.1} parent=1 // loop_header
      %s13 = sphi 0, %s17
      %p14 = scmp.ge.s32.totalorder %s13, 4
      %s23 = sphi 0, %s25
      %s26 = sphi 0, %s23
      %s27 = sphi 0, %s26
      %s43 = sphi 0, %s27
      %s49 = sphi 0, %s51
      %s52 = sphi 0, %s49
      %s53 = sphi 0, %s52
      %s69 = sphi 0, %s53
    $region4: #{tpu_custom_call.1} parent=1 // loop_header_branch
      %16 = sbr.rel (%p14) target = $region8
    $region5: #{tpu_custom_call.1} parent=1 // loop_body
      %s18 = ssub.s32 %s13, 1
      %s19 = ssub.s32 %s13, 2
      %s20 = sadd.s32 %s13, 1
      %s21 = ssub.s32 %s13, %s20
      %p22 = scmp.eq.s32.totalorder %s21, 0
      %s24 = sadd.s32 %s23, 1
      %s25 = scalar_select %p22, %s23, %s24
      %p28 = pneg %p22
      %p29 = scmp.eq.s32.totalorder %s13, 1
      %p30 = por %p28, %p29
      %p31 = scmp.ne.s32.totalorder %s23, %s26
      %p32 = scmp.eq.s32.totalorder %s13, 0
      %p33 = por %p31, %p32
      %p34 = scmp.ne.s32.totalorder %s23, %s26
      %p35 = scmp.eq.s32.totalorder %s18, 1
      %p36 = por %p34, %p35
      %p37 = scmp.ne.s32.totalorder %s26, %s27
      %p38 = scmp.eq.s32.totalorder %s18, 0
      %p39 = por %p37, %p38
      %p40 = scmp.ne.s32.totalorder %s26, %s27
      %p41 = scmp.eq.s32.totalorder %s19, 1
      %p42 = por %p40, %p41
      %p44 = scmp.ne.s32.totalorder %s27, %s43
      %p45 = scmp.eq.s32.totalorder %s19, 0
      %p46 = por %p44, %p45
      %s47 = ssub.s32 %s13, %s20
      %p48 = scmp.eq.s32.totalorder %s47, 0
      %s50 = sadd.s32 %s49, 1
      %s51 = scalar_select %p48, %s49, %s50
      %p54 = pneg %p48
      %p55 = scmp.eq.s32.totalorder %s13, 1
      %p56 = por %p54, %p55
      %p57 = scmp.ne.s32.totalorder %s49, %s52
      %p58 = scmp.eq.s32.totalorder %s13, 0
      %p59 = por %p57, %p58
      %p60 = scmp.ne.s32.totalorder %s49, %s52
      %p61 = scmp.eq.s32.totalorder %s18, 1
      %p62 = por %p60, %p61
      %p63 = scmp.ne.s32.totalorder %s52, %s53
      %p64 = scmp.eq.s32.totalorder %s18, 0
      %p65 = por %p63, %p64
      %p66 = scmp.ne.s32.totalorder %s52, %s53
      %p67 = scmp.eq.s32.totalorder %s19, 1
      %p68 = por %p66, %p67
      %p70 = scmp.ne.s32.totalorder %s53, %s69
      %p71 = scmp.eq.s32.totalorder %s19, 0
      %p72 = por %p70, %p71
      %p73 = scmp.le.s32.totalorder 1, %s13
      %p74 = scmp.lt.s32.totalorder %s13, 3
      %p75 = pnand %p73, %p74
      %p76 = pneg %p75
      // Predicated region
      $region9: #{tpu_custom_call.1} parent=5 // pred_check
        _
      $region10: #{tpu_custom_call.1} parent=5 // pred_check_branch
        %78 = sbr.rel (%p75) target = $region12
      $region11: #{tpu_custom_call.1} parent=5 // pred_region
        %s79 = ssub.s32 %s13, 1
      $region12: #{tpu_custom_call.1} parent=5 // pred_fallthru
        _
      %p80 = scmp.lt.s32.totalorder %s13, 2
      // Predicated region
      $region13: #{tpu_custom_call.1} parent=5 // pred_check
        %p81 = pneg %p80
      $region14: #{tpu_custom_call.1} parent=5 // pred_check_branch
        %83 = sbr.rel (%p81) target = $region16
      $region15: #{tpu_custom_call.1} parent=5 // pred_region
        // Predicated region
        $region17: #{tpu_custom_call.1} parent=15 // pred_check
          %p84 = pneg %p33
        $region18: #{tpu_custom_call.1} parent=15 // pred_check_branch
          %86 = sbr.rel (%p84) target = $region20
        $region19: #{tpu_custom_call.1} parent=15 // pred_region
          %s87 = sand.u32 %s23, 1
          %s88 = scalar_lea.sflag [#allocation4], %s87
          %s89 = sand.u32 %s23, 1
          %s90 = smul.addr %s89, 256
          %s91 = scalar_lea.vmem [#allocation3], %s90
          %s92 = smul.u32 16, %s13
          %s94 = ssub.s32 4096, 4096
          %95 = vsyncadd %s88, %s94
          %s96 = smul.addr %s92, 2
          %s97 = smul.addr %s96, 128
          %s98 = scalar_lea.hbm %s0, %s97
          %s99 = sshll.u32 %s91, 4
          %s100 = int_to_ptr.vmem [resolvable:$true] %s99
          %105 = dma.hbm_to_vmem [thread:$0]  %s98, 4096, %s100, %s88, 256, 256, 16
        $region20: #{tpu_custom_call.1} parent=15 // pred_fallthru
          _
      $region16: #{tpu_custom_call.1} parent=5 // pred_fallthru
        _
      %p106 = scmp.le.s32.totalorder 1, %s13
      %p107 = scmp.lt.s32.totalorder %s13, 3
      %p108 = pnand %p106, %p107
      %p109 = pneg %p108
      // Predicated region
      $region21: #{tpu_custom_call.1} parent=5 // pred_check
        _
      $region22: #{tpu_custom_call.1} parent=5 // pred_check_branch
        %111 = sbr.rel (%p108) target = $region24
      $region23: #{tpu_custom_call.1} parent=5 // pred_region
        %s112 = ssub.s32 %s13, 1
        %s113 = sand.u32 %s26, 1
        %s114 = scalar_lea.sflag [#allocation4], %s113
        %s115 = sand.u32 %s26, 1
        %s116 = smul.addr %s115, 256
        %s117 = scalar_lea.vmem [#allocation3], %s116
        // Predicated region
        $region25: #{tpu_custom_call.1} parent=23 // pred_check
          %p118 = pneg %p39
        $region26: #{tpu_custom_call.1} parent=23 // pred_check_branch
          %120 = sbr.rel (%p118) target = $region28
        $region27: #{tpu_custom_call.1} parent=23 // pred_region
          %121 = dma.done %s114, 4096
        $region28: #{tpu_custom_call.1} parent=23 // pred_fallthru
          _
        %s122 = sand.u32 %s26, 1
        %s123 = scalar_lea.sflag [#allocation4], %s122
        %s124 = sand.u32 %s26, 1
        %s125 = smul.addr %s124, 256
        %s126 = scalar_lea.vmem [#allocation3], %s125
        %p127 = pneg %p39
        %p128 = pneg %p36
        %p129 = pneg %p65
        %p130 = pneg %p62
        %s131 = sand.u32 %s52, 1
        %s132 = scalar_lea.sflag [#allocation5], %s131
        %s133 = sand.u32 %s52, 1
        %s134 = smul.addr %s133, 128
        %s135 = scalar_lea.vmem [#allocation6], %s134
        %s136 = smul.u32 16, %s18
        %s137 = smul.u32 16, %s18
        %v138 = vld [vmem:[%s117] sm:$0xff]
        %v139 = vld [vmem:[%s117 + $0x10] sm:$0xff]
        %v140 = vld [vmem:[%s117 + $0x20] sm:$0xff]
        %v141 = vld [vmem:[%s117 + $0x30] sm:$0xff]
        %v142 = vld [vmem:[%s117 + $0x40] sm:$0xff]
        %v143 = vld [vmem:[%s117 + $0x50] sm:$0xff]
        %v144 = vld [vmem:[%s117 + $0x60] sm:$0xff]
        %v145 = vld [vmem:[%s117 + $0x70] sm:$0xff]
        %v146 = vld [vmem:[%s117 + $0x80] sm:$0xff]
        %v147 = vld [vmem:[%s117 + $0x90] sm:$0xff]
        %v148 = vld [vmem:[%s117 + $0xa0] sm:$0xff]
        %v149 = vld [vmem:[%s117 + $0xb0] sm:$0xff]
        %v150 = vld [vmem:[%s117 + $0xc0] sm:$0xff]
        %v151 = vld [vmem:[%s117 + $0xd0] sm:$0xff]
        %v152 = vld [vmem:[%s117 + $0xe0] sm:$0xff]
        %v153 = vld [vmem:[%s117 + $0xf0] sm:$0xff]
        %154 = vxpose.xlu0.b32.start [1/16] %v138, 128
        %155 = vxpose.xlu0.b32.cont [2/16] %v139, 128
        %156 = vxpose.xlu0.b32.cont [3/16] %v140, 128
        %157 = vxpose.xlu0.b32.cont [4/16] %v141, 128
        %158 = vxpose.xlu0.b32.cont [5/16] %v142, 128
        %159 = vxpose.xlu0.b32.cont [6/16] %v143, 128
        %160 = vxpose.xlu0.b32.cont [7/16] %v144, 128
        %161 = vxpose.xlu0.b32.cont [8/16] %v145, 128
        %162 = vxpose.xlu0.b32.cont [9/16] %v146, 128
        %163 = vxpose.xlu0.b32.cont [10/16] %v147, 128
        %164 = vxpose.xlu0.b32.cont [11/16] %v148, 128
        %165 = vxpose.xlu0.b32.cont [12/16] %v149, 128
        %166 = vxpose.xlu0.b32.cont [13/16] %v150, 128
        %167 = vxpose.xlu0.b32.cont [14/16] %v151, 128
        %168 = vxpose.xlu0.b32.cont [15/16] %v152, 128
        %169 = vxpose.xlu0.b32.end [16/16] %v153, 128
        %v170 = vpop.trf.xlu0
        %v171 = vpop.trf.xlu0
        %v172 = vpop.trf.xlu0
        %v173 = vpop.trf.xlu0
        %v174 = vpop.trf.xlu0
        %v175 = vpop.trf.xlu0
        %v176 = vpop.trf.xlu0
        %v177 = vpop.trf.xlu0
        %v178 = vpop.trf.xlu0
        %v179 = vpop.trf.xlu0
        %v180 = vpop.trf.xlu0
        %v181 = vpop.trf.xlu0
        %v182 = vpop.trf.xlu0
        %v183 = vpop.trf.xlu0
        %v184 = vpop.trf.xlu0
        %v185 = vpop.trf.xlu0
        %186 = vst [vmem:[#allocation2] sm:$0xff] %v170
        %187 = vst [vmem:[#allocation2 + $0x8] sm:$0xff] %v171
        %188 = vst [vmem:[#allocation2 + $0x10] sm:$0xff] %v172
        %189 = vst [vmem:[#allocation2 + $0x18] sm:$0xff] %v173
        %190 = vst [vmem:[#allocation2 + $0x20] sm:$0xff] %v174
        %191 = vst [vmem:[#allocation2 + $0x28] sm:$0xff] %v175
        %192 = vst [vmem:[#allocation2 + $0x30] sm:$0xff] %v176
        %193 = vst [vmem:[#allocation2 + $0x38] sm:$0xff] %v177
        %194 = vst [vmem:[#allocation2 + $0x40] sm:$0xff] %v178
        %195 = vst [vmem:[#allocation2 + $0x48] sm:$0xff] %v179
        %196 = vst [vmem:[#allocation2 + $0x50] sm:$0xff] %v180
        %197 = vst [vmem:[#allocation2 + $0x58] sm:$0xff] %v181
        %198 = vst [vmem:[#allocation2 + $0x60] sm:$0xff] %v182
        %199 = vst [vmem:[#allocation2 + $0x68] sm:$0xff] %v183
        %200 = vst [vmem:[#allocation2 + $0x70] sm:$0xff] %v184
        %201 = vst [vmem:[#allocation2 + $0x78] sm:$0xff] %v185
        %v202 = vld [vmem:[%s117 + $0x8] sm:$0xff]
        %v203 = vld [vmem:[%s117 + $0x18] sm:$0xff]
        %v204 = vld [vmem:[%s117 + $0x28] sm:$0xff]
        %v205 = vld [vmem:[%s117 + $0x38] sm:$0xff]
        %v206 = vld [vmem:[%s117 + $0x48] sm:$0xff]
        %v207 = vld [vmem:[%s117 + $0x58] sm:$0xff]
        %v208 = vld [vmem:[%s117 + $0x68] sm:$0xff]
        %v209 = vld [vmem:[%s117 + $0x78] sm:$0xff]
        %v210 = vld [vmem:[%s117 + $0x88] sm:$0xff]
        %v211 = vld [vmem:[%s117 + $0x98] sm:$0xff]
        %v212 = vld [vmem:[%s117 + $0xa8] sm:$0xff]
        %v213 = vld [vmem:[%s117 + $0xb8] sm:$0xff]
        %v214 = vld [vmem:[%s117 + $0xc8] sm:$0xff]
        %v215 = vld [vmem:[%s117 + $0xd8] sm:$0xff]
        %v216 = vld [vmem:[%s117 + $0xe8] sm:$0xff]
        %v217 = vld [vmem:[%s117 + $0xf8] sm:$0xff]
        %218 = vxpose.xlu0.b32.start [1/16] %v202, 128
        %219 = vxpose.xlu0.b32.cont [2/16] %v203, 128
        %220 = vxpose.xlu0.b32.cont [3/16] %v204, 128
        %221 = vxpose.xlu0.b32.cont [4/16] %v205, 128
        %222 = vxpose.xlu0.b32.cont [5/16] %v206, 128
        %223 = vxpose.xlu0.b32.cont [6/16] %v207, 128
        %224 = vxpose.xlu0.b32.cont [7/16] %v208, 128
        %225 = vxpose.xlu0.b32.cont [8/16] %v209, 128
        %226 = vxpose.xlu0.b32.cont [9/16] %v210, 128
        %227 = vxpose.xlu0.b32.cont [10/16] %v211, 128
        %228 = vxpose.xlu0.b32.cont [11/16] %v212, 128
        %229 = vxpose.xlu0.b32.cont [12/16] %v213, 128
        %230 = vxpose.xlu0.b32.cont [13/16] %v214, 128
        %231 = vxpose.xlu0.b32.cont [14/16] %v215, 128
        %232 = vxpose.xlu0.b32.cont [15/16] %v216, 128
        %233 = vxpose.xlu0.b32.end [16/16] %v217, 128
        %v234 = vpop.trf.xlu0
        %v235 = vpop.trf.xlu0
        %v236 = vpop.trf.xlu0
        %v237 = vpop.trf.xlu0
        %v238 = vpop.trf.xlu0
        %v239 = vpop.trf.xlu0
        %v240 = vpop.trf.xlu0
        %v241 = vpop.trf.xlu0
        %v242 = vpop.trf.xlu0
        %v243 = vpop.trf.xlu0
        %v244 = vpop.trf.xlu0
        %v245 = vpop.trf.xlu0
        %v246 = vpop.trf.xlu0
        %v247 = vpop.trf.xlu0
        %v248 = vpop.trf.xlu0
        %v249 = vpop.trf.xlu0
        %250 = vst [vmem:[#allocation2 + $0x80] sm:$0xff] %v234
        %251 = vst [vmem:[#allocation2 + $0x88] sm:$0xff] %v235
        %252 = vst [vmem:[#allocation2 + $0x90] sm:$0xff] %v236
        %253 = vst [vmem:[#allocation2 + $0x98] sm:$0xff] %v237
        %254 = vst [vmem:[#allocation2 + $0xa0] sm:$0xff] %v238
        %255 = vst [vmem:[#allocation2 + $0xa8] sm:$0xff] %v239
        %256 = vst [vmem:[#allocation2 + $0xb0] sm:$0xff] %v240
        %257 = vst [vmem:[#allocation2 + $0xb8] sm:$0xff] %v241
        %258 = vst [vmem:[#allocation2 + $0xc0] sm:$0xff] %v242
        %259 = vst [vmem:[#allocation2 + $0xc8] sm:$0xff] %v243
        %260 = vst [vmem:[#allocation2 + $0xd0] sm:$0xff] %v244
        %261 = vst [vmem:[#allocation2 + $0xd8] sm:$0xff] %v245
        %262 = vst [vmem:[#allocation2 + $0xe0] sm:$0xff] %v246
        %263 = vst [vmem:[#allocation2 + $0xe8] sm:$0xff] %v247
        %264 = vst [vmem:[#allocation2 + $0xf0] sm:$0xff] %v248
        %265 = vst [vmem:[#allocation2 + $0xf8] sm:$0xff] %v249
        %v266 = vld [vmem:[#allocation2] ss:$2 sm:$0xff]
        %s267 = scalar_lea.vmem [#allocation2], 16
        %v268 = vld [vmem:[%s267] ss:$2 sm:$0xff]
        %s269 = scalar_lea.vmem [#allocation2], 32
        %v270 = vld [vmem:[%s269] ss:$2 sm:$0xff]
        %s271 = scalar_lea.vmem [#allocation2], 48
        %v272 = vld [vmem:[%s271] ss:$2 sm:$0xff]
        %s273 = scalar_lea.vmem [#allocation2], 64
        %v274 = vld [vmem:[%s273] ss:$2 sm:$0xff]
        %s275 = scalar_lea.vmem [#allocation2], 80
        %v276 = vld [vmem:[%s275] ss:$2 sm:$0xff]
        %s277 = scalar_lea.vmem [#allocation2], 96
        %v278 = vld [vmem:[%s277] ss:$2 sm:$0xff]
        %s279 = scalar_lea.vmem [#allocation2], 112
        %v280 = vld [vmem:[%s279] ss:$2 sm:$0xff]
        %s281 = scalar_lea.vmem [#allocation2], 128
        %v282 = vld [vmem:[%s281] ss:$2 sm:$0xff]
        %s283 = scalar_lea.vmem [#allocation2], 144
        %v284 = vld [vmem:[%s283] ss:$2 sm:$0xff]
        %s285 = scalar_lea.vmem [#allocation2], 160
        %v286 = vld [vmem:[%s285] ss:$2 sm:$0xff]
        %s287 = scalar_lea.vmem [#allocation2], 176
        %v288 = vld [vmem:[%s287] ss:$2 sm:$0xff]
        %s289 = scalar_lea.vmem [#allocation2], 192
        %v290 = vld [vmem:[%s289] ss:$2 sm:$0xff]
        %s291 = scalar_lea.vmem [#allocation2], 208
        %v292 = vld [vmem:[%s291] ss:$2 sm:$0xff]
        %s293 = scalar_lea.vmem [#allocation2], 224
        %v294 = vld [vmem:[%s293] ss:$2 sm:$0xff]
        %s295 = scalar_lea.vmem [#allocation2], 240
        %v296 = vld [vmem:[%s295] ss:$2 sm:$0xff]
        %297 = vxpose.xlu0.b32.start [1/16] %v266, 128
        %298 = vxpose.xlu0.b32.cont [2/16] %v268, 128
        %299 = vxpose.xlu0.b32.cont [3/16] %v270, 128
        %300 = vxpose.xlu0.b32.cont [4/16] %v272, 128
        %301 = vxpose.xlu0.b32.cont [5/16] %v274, 128
        %302 = vxpose.xlu0.b32.cont [6/16] %v276, 128
        %303 = vxpose.xlu0.b32.cont [7/16] %v278, 128
        %304 = vxpose.xlu0.b32.cont [8/16] %v280, 128
        %305 = vxpose.xlu0.b32.cont [9/16] %v282, 128
        %306 = vxpose.xlu0.b32.cont [10/16] %v284, 128
        %307 = vxpose.xlu0.b32.cont [11/16] %v286, 128
        %308 = vxpose.xlu0.b32.cont [12/16] %v288, 128
        %309 = vxpose.xlu0.b32.cont [13/16] %v290, 128
        %310 = vxpose.xlu0.b32.cont [14/16] %v292, 128
        %311 = vxpose.xlu0.b32.cont [15/16] %v294, 128
        %312 = vxpose.xlu0.b32.end [16/16] %v296, 128
        %v313 = vpop.trf.xlu0
        %v314 = vpop.trf.xlu0
        %v315 = vpop.trf.xlu0
        %v316 = vpop.trf.xlu0
        %v317 = vpop.trf.xlu0
        %v318 = vpop.trf.xlu0
        %v319 = vpop.trf.xlu0
        %v320 = vpop.trf.xlu0
        %v321 = vpop.trf.xlu0
        %v322 = vpop.trf.xlu0
        %v323 = vpop.trf.xlu0
        %v324 = vpop.trf.xlu0
        %v325 = vpop.trf.xlu0
        %v326 = vpop.trf.xlu0
        %v327 = vpop.trf.xlu0
        %v328 = vpop.trf.xlu0
        %329 = vst [vmem:[%s135] sm:$0xff] %v313
        %330 = vst [vmem:[%s135 + $0x8] sm:$0xff] %v314
        %331 = vst [vmem:[%s135 + $0x10] sm:$0xff] %v315
        %332 = vst [vmem:[%s135 + $0x18] sm:$0xff] %v316
        %333 = vst [vmem:[%s135 + $0x20] sm:$0xff] %v317
        %334 = vst [vmem:[%s135 + $0x28] sm:$0xff] %v318
        %335 = vst [vmem:[%s135 + $0x30] sm:$0xff] %v319
        %336 = vst [vmem:[%s135 + $0x38] sm:$0xff] %v320
        %337 = vst [vmem:[%s135 + $0x40] sm:$0xff] %v321
        %338 = vst [vmem:[%s135 + $0x48] sm:$0xff] %v322
        %339 = vst [vmem:[%s135 + $0x50] sm:$0xff] %v323
        %340 = vst [vmem:[%s135 + $0x58] sm:$0xff] %v324
        %341 = vst [vmem:[%s135 + $0x60] sm:$0xff] %v325
        %342 = vst [vmem:[%s135 + $0x68] sm:$0xff] %v326
        %343 = vst [vmem:[%s135 + $0x70] sm:$0xff] %v327
        %344 = vst [vmem:[%s135 + $0x78] sm:$0xff] %v328
        %s345 = sand.u32 %s52, 1
        %s346 = scalar_lea.sflag [#allocation5], %s345
        %s347 = sand.u32 %s52, 1
        %s348 = smul.addr %s347, 128
        %s349 = scalar_lea.vmem [#allocation6], %s348
        // Predicated region
        $region29: #{tpu_custom_call.1} parent=23 // pred_check
          %p350 = pneg %p62
        $region30: #{tpu_custom_call.1} parent=23 // pred_check_branch
          %352 = sbr.rel (%p350) target = $region32
        $region31: #{tpu_custom_call.1} parent=23 // pred_region
          %s353 = smul.u32 16, %s18
          %s355 = ssub.s32 2048, 2048
          %356 = vsyncadd %s346, %s355
          %s357 = smul.addr %s353, 128
          %s358 = scalar_lea.hbm %s1, %s357
          %s359 = sshll.u32 %s349, 4
          %s360 = int_to_ptr.vmem [resolvable:$true] %s359
          %365 = dma.vmem_to_hbm [thread:$0]  %s360, 2048, %s358, %s346, 128, 128, 8
        $region32: #{tpu_custom_call.1} parent=23 // pred_fallthru
          _
      $region24: #{tpu_custom_call.1} parent=5 // pred_fallthru
        _
      %p366 = scmp.le.s32.totalorder 2, %s13
      // Predicated region
      $region33: #{tpu_custom_call.1} parent=5 // pred_check
        %p367 = pneg %p366
      $region34: #{tpu_custom_call.1} parent=5 // pred_check_branch
        %369 = sbr.rel (%p367) target = $region36
      $region35: #{tpu_custom_call.1} parent=5 // pred_region
        %s370 = ssub.s32 %s13, 2
        // Predicated region
        $region37: #{tpu_custom_call.1} parent=35 // pred_check
          %p371 = pneg %p68
        $region38: #{tpu_custom_call.1} parent=35 // pred_check_branch
          %373 = sbr.rel (%p371) target = $region40
        $region39: #{tpu_custom_call.1} parent=35 // pred_region
          %s374 = sand.u32 %s53, 1
          %s375 = scalar_lea.sflag [#allocation5], %s374
          %s376 = sand.u32 %s53, 1
          %s377 = smul.addr %s376, 128
          %s378 = scalar_lea.vmem [#allocation6], %s377
          %379 = dma.done %s375, 2048
        $region40: #{tpu_custom_call.1} parent=35 // pred_fallthru
          _
      $region36: #{tpu_custom_call.1} parent=5 // pred_fallthru
        _
    $region6: #{tpu_custom_call.1} parent=1 // loop_footer
      %s17 = sadd.s32 1, %s13
    $region7: #{tpu_custom_call.1} parent=1 // loop_footer_branch
      %12 = sbr.rel target = $region3
    $region8: #{tpu_custom_call.1} parent=1 // loop_exit
      _
    %380 = vsyncpa [#allocation4], 1
    %s381 = scalar_lea.sflag [#allocation4], 1
    %382 = vsyncpa %s381, 1
    %383 = vsyncpa [#allocation5], 1
    %s384 = scalar_lea.sflag [#allocation5], 1
    %385 = vsyncpa %s384, 1

</llo_original>
